<compile_context>
chip_gen: v7x
topology: tpu7x:2x2x1
jax: 0.10.0
libtpu: 0.0.40
codegen_flags: <defaults>
</compile_context>

<pallas_src>
import jax
import jax.numpy as jnp
from jax.experimental import pallas as pl
from jax.experimental.pallas import tpu as pltpu


def get_padding(kernel_size, stride=2, dilation=1):
    effective_kernel = dilation * (kernel_size - 1) + 1
    return (stride - 1 + effective_kernel - 1) // 2


def _const_idx(nd):
    return lambda b: (0,) * nd


# --------------------------------------------------------------------------- #
# Pallas kernel
# --------------------------------------------------------------------------- #
def _make_kernel(TB, L, Lout, K, stride, pad, Cin, Cmid, Cout,
                 has_expand, use_residual, n_in):
    """Builds the per-batch-tile kernel.  All shapes / flags are static."""

    def silu(v):
        return v * jax.nn.sigmoid(v)

    def kernel(*refs):
        in_refs = refs[:n_in]
        out_ref = refs[n_in]
        scratch = refs[n_in + 1:]
        h_slab = scratch[0]                                   # (TB, L+2p, Cmid)
        x_slab = scratch[1] if use_residual else None         # (TB, L+2p, Cin)

        it = iter(in_refs)
        x = next(it)[...]                                      # (TB, L, Cin)
        w_exp = next(it)[...] if has_expand else None          # (Cin, Cmid)
        w_dw = next(it)[...]                                   # (K, Cmid)
        w_se1 = next(it)[...]                                  # (Cmid, Cse)
        w_se2 = next(it)[...]                                  # (Cse, Cmid)
        w_pr = next(it)[...]                                   # (Cmid, Cout)
        w_p = next(it)[...] if use_residual else None          # (K*Cin, Cout)
        bias = next(it)[...]                                   # (4, Cmax)

        b_exp = bias[0:1, :Cmid]                               # (1, Cmid)
        b_dw = bias[1:2, :Cmid].reshape(1, 1, Cmid)
        b_pr = bias[2:3, :Cout]
        b_p = bias[3:4, :Cout]

        def load_taps(v, slab, C):
            """Write v into a zero-padded VMEM slab, return K shifted taps.

            Explicitly zero-pads the halo so boundary outputs match the
            zero-padded conv semantics."""
            Lsrc = v.shape[1]
            if pad > 0:
                edge = jnp.zeros((TB, pad, C), jnp.float32)
                slab[:, pl.ds(0, pad), :] = edge
                slab[:, pl.ds(pad + Lsrc, pad), :] = edge
            slab[:, pl.ds(pad, Lsrc), :] = v
            taps = []
            for t in range(K):                                 # static taps
                if stride == 1:
                    taps.append(slab[:, pl.ds(t, Lout), :])
                else:
                    taps.append(slab[:, pl.ds(t, Lout, stride=stride), :])
            return taps

        # 1) expansion 1x1 conv (BN scale folded into w_exp) + bias + SiLU ----
        if has_expand:
            h = jnp.dot(x.reshape(TB * L, Cin), w_exp,
                        preferred_element_type=jnp.float32) + b_exp
            h = silu(h).reshape(TB, L, Cmid)
        else:
            h = x

        # 2) depthwise conv: K shifted taps, pure VPU multiply-adds ----------
        taps = load_taps(h, h_slab, Cmid)
        dw = taps[0] * w_dw[0:1, :].reshape(1, 1, Cmid)
        for t in range(1, K):
            dw = dw + taps[t] * w_dw[t:t + 1, :].reshape(1, 1, Cmid)
        dw = silu(dw + b_dw)

        # 3) squeeze-and-excite (batched over TB) ----------------------------
        pooled = jnp.mean(dw, axis=1)                          # (TB, Cmid)
        se = silu(jnp.dot(pooled, w_se1, preferred_element_type=jnp.float32))
        se = jax.nn.sigmoid(jnp.dot(se, w_se2,
                                    preferred_element_type=jnp.float32))
        dw = dw * se[:, None, :]

        # 4) projection 1x1 conv + bias + SiLU -------------------------------
        y = jnp.dot(dw.reshape(TB * Lout, Cmid), w_pr,
                    preferred_element_type=jnp.float32) + b_pr
        y = silu(y).reshape(TB, Lout, Cout)

        # 5) residual branch: full KxCinxCout conv as a single im2col matmul -
        if use_residual:
            xt = load_taps(x, x_slab, Cin)
            xcat = jnp.concatenate(xt, axis=-1)                # (TB, Lout, K*Cin)
            idy = jnp.dot(xcat.reshape(TB * Lout, K * Cin), w_p,
                          preferred_element_type=jnp.float32) + b_p
            y = y + silu(idy).reshape(TB, Lout, Cout)

        out_ref[...] = y.astype(out_ref.dtype)

    return kernel


def efficientnet_block_pallas(x_nlc, kp, cfg, batch_tile=None):
    """x_nlc: (B, L, Cin) float32.  Returns (B, Lout, Cout) float32."""
    B, L, Cin = x_nlc.shape
    K = cfg["kernel_size"]
    stride = 2 if cfg["downsample"] else 1
    pad = get_padding(K, stride)
    Lout = (L + 2 * pad - K) // stride + 1
    Cout = cfg["out_channels"]
    er = cfg["expansion_ratio"]
    Cmid = Cin * er
    has_expand = er > 1
    use_residual = cfg["use_residual"]

    # Batch several samples per grid step so matmul M-dims approach the MXU
    # row count and per-step overhead is amortized; cap TB so the padded
    # activation slabs stay well inside VMEM (double-buffered input included).
    if batch_tile is None:
        slab_bytes = 4 * (L + 2 * pad) * (Cmid + (Cin if use_residual else 0))
        max_tb_vmem = max(1, (8 << 20) // max(slab_bytes, 1))
        batch_tile = max(1, min(B, max(1, 256 // max(L, 1)), max_tb_vmem))
    TB = batch_tile
    Bpad = -(-B // TB) * TB
    if Bpad != B:
        x_nlc = jnp.concatenate(
            [x_nlc, jnp.zeros((Bpad - B, L, Cin), x_nlc.dtype)], axis=0)

    weights = []
    if has_expand:
        weights.append(kp["w_exp"])
    weights += [kp["w_dw"], kp["w_se1"], kp["w_se2"], kp["w_pr"]]
    if use_residual:
        weights.append(kp["w_p"])
    weights.append(kp["bias"])
    n_in = 1 + len(weights)

    in_specs = [pl.BlockSpec((TB, L, Cin), lambda b: (b, 0, 0))]
    for w in weights:
        in_specs.append(pl.BlockSpec(w.shape, _const_idx(w.ndim)))

    scratch_shapes = [pltpu.VMEM((TB, L + 2 * pad, Cmid), jnp.float32)]
    if use_residual:
        scratch_shapes.append(pltpu.VMEM((TB, L + 2 * pad, Cin), jnp.float32))

    kernel = _make_kernel(TB, L, Lout, K, stride, pad, Cin, Cmid, Cout,
                          has_expand, use_residual, n_in)

    out = pl.pallas_call(
        kernel,
        out_shape=jax.ShapeDtypeStruct((Bpad, Lout, Cout), jnp.float32),
        grid=(Bpad // TB,),
        in_specs=in_specs,
        out_specs=pl.BlockSpec((TB, Lout, Cout), lambda b: (b, 0, 0)),
        scratch_shapes=scratch_shapes,
        compiler_params=pltpu.CompilerParams(
            # Batch tiles are independent -> shard across TensorCores on v7x.
            dimension_semantics=("parallel",)),
    )(x_nlc, *weights)
    return out[:B]


# --------------------------------------------------------------------------- #
# Parameter construction (deterministic, PyTorch-layout), BN folding
# --------------------------------------------------------------------------- #
def init_params(key, cfg):
    Cin, Cout = cfg["in_channels"], cfg["out_channels"]
    K, er = cfg["kernel_size"], cfg["expansion_ratio"]
    Cmid = Cin * er
    Cse = Cmid // cfg["se_reduction_ratio"]
    keys = jax.random.split(key, 10)

    def conv_w(k, shape):
        fan_in = shape[1] * shape[2]
        return jax.random.normal(k, shape, jnp.float32) / jnp.sqrt(float(fan_in))

    def bn_p(k, c):
        k1, k2, k3, k4 = jax.random.split(k, 4)
        g = 1.0 + 0.1 * jax.random.normal(k1, (c,), jnp.float32)
        b = 0.1 * jax.random.normal(k2, (c,), jnp.float32)
        m = 0.1 * jax.random.normal(k3, (c,), jnp.float32)
        v = 0.5 + jax.random.uniform(k4, (c,), jnp.float32)
        return (g, b, m, v)

    P = {}
    if er > 1:
        P["w_exp"] = conv_w(keys[0], (Cmid, Cin, 1))
        P["bn_exp"] = bn_p(keys[1], Cmid)
    P["w_dw"] = conv_w(keys[2], (Cmid, 1, K))
    P["bn_dw"] = bn_p(keys[3], Cmid)
    P["w_se1"] = jax.random.normal(keys[4], (Cse, Cmid), jnp.float32) / jnp.sqrt(float(Cmid))
    P["w_se2"] = jax.random.normal(keys[5], (Cmid, Cse), jnp.float32) / jnp.sqrt(float(Cse))
    P["w_pr"] = conv_w(keys[6], (Cout, Cmid, 1))
    P["bn_pr"] = bn_p(keys[7], Cout)
    P["w_p"] = conv_w(keys[8], (Cout, Cin, K))
    P["bn_p"] = bn_p(keys[9], Cout)
    return P


def _fold_bn(bn, eps=1e-5):
    g, b, m, v = bn
    scale = g / jnp.sqrt(v + eps)
    bias = b - m * scale
    return scale[None, :], bias[None, :]


def to_kernel_params(P, cfg):
    """Folds BN scales into conv weights; packs biases into one array."""
    Cin, Cout = cfg["in_channels"], cfg["out_channels"]
    K, er = cfg["kernel_size"], cfg["expansion_ratio"]
    Cmid = Cin * er
    KP = {}

    if er > 1:
        s, b_exp = _fold_bn(P["bn_exp"])
        KP["w_exp"] = jnp.transpose(P["w_exp"][:, :, 0]) * s          # (Cin, Cmid)
    else:
        b_exp = jnp.zeros((1, Cmid), jnp.float32)

    s, b_dw = _fold_bn(P["bn_dw"])
    KP["w_dw"] = jnp.transpose(P["w_dw"][:, 0, :]) * s                # (K, Cmid)

    KP["w_se1"] = jnp.transpose(P["w_se1"])                           # (Cmid, Cse)
    KP["w_se2"] = jnp.transpose(P["w_se2"])                           # (Cse, Cmid)

    s, b_pr = _fold_bn(P["bn_pr"])
    KP["w_pr"] = jnp.transpose(P["w_pr"][:, :, 0]) * s                # (Cmid, Cout)

    if cfg["use_residual"]:
        s, b_p = _fold_bn(P["bn_p"])
        # im2col weight: row index = t*Cin + cin  -> (K*Cin, Cout)
        KP["w_p"] = jnp.transpose(P["w_p"], (2, 1, 0)).reshape(K * Cin, Cout) * s
    else:
        b_p = jnp.zeros((1, Cout), jnp.float32)

    Cmax = max(Cmid, Cout)

    def row(v):
        return jnp.pad(v, ((0, 0), (0, Cmax - v.shape[1])))

    KP["bias"] = jnp.concatenate([row(b_exp), row(b_dw), row(b_pr), row(b_p)],
                                 axis=0)                              # (4, Cmax)
    return KP


# --------------------------------------------------------------------------- #
# Pure-JAX reference mirroring the PyTorch module (NCL layout, eval-mode BN)
# --------------------------------------------------------------------------- #
def reference_ncl(x, P, cfg, eps=1e-5):
    K = cfg["kernel_size"]
    stride = 2 if cfg["downsample"] else 1
    pad = get_padding(K, stride)
    Cmid = cfg["in_channels"] * cfg["expansion_ratio"]
    dn = ("NCH", "OIH", "NCH")

    def bn(h, p):
        g, b, m, v = p
        return (h - m[None, :, None]) * (g / jnp.sqrt(v + eps))[None, :, None] + b[None, :, None]

    silu = lambda h: h * jax.nn.sigmoid(h)

    h = x
    if cfg["expansion_ratio"] > 1:
        h = jax.lax.conv_general_dilated(h, P["w_exp"], (1,), [(0, 0)], dimension_numbers=dn)
        h = silu(bn(h, P["bn_exp"]))
    h = jax.lax.conv_general_dilated(h, P["w_dw"], (stride,), [(pad, pad)],
                                     dimension_numbers=dn, feature_group_count=Cmid)
    h = silu(bn(h, P["bn_dw"]))
    # SEBlock
    w = jnp.mean(h, axis=2)
    w = w @ P["w_se1"].T
    w = silu(w)
    w = w @ P["w_se2"].T
    w = jax.nn.sigmoid(w)
    h = h * w[:, :, None]
    # projection
    h = jax.lax.conv_general_dilated(h, P["w_pr"], (1,), [(0, 0)], dimension_numbers=dn)
    h = silu(bn(h, P["bn_pr"]))
    if cfg["use_residual"]:
        idy = jax.lax.conv_general_dilated(x, P["w_p"], (stride,), [(pad, pad)],
                                           dimension_numbers=dn)
        idy = silu(bn(idy, P["bn_p"]))
        h = h + idy
    return h


# --------------------------------------------------------------------------- #
if __name__ == "__main__":
    cfg = dict(
        in_channels=4,
        out_channels=8,
        kernel_size=3,
        expansion_ratio=4,
        use_residual=True,
        se_reduction_ratio=4,
        downsample=False,
    )
    B, L = 2, 16

    key = jax.random.PRNGKey(0)
    kx, kp = jax.random.split(key)
    x_ncl = jax.random.normal(kx, (B, cfg["in_channels"], L), jnp.float32)  # PyTorch layout

    P = init_params(kp, cfg)
    KP = to_kernel_params(P, cfg)

    x_nlc = jnp.transpose(x_ncl, (0, 2, 1))                 # kernel layout NLC
    out_nlc = efficientnet_block_pallas(x_nlc, KP, cfg)
    out_nlc = jax.block_until_ready(out_nlc)

    ref = reference_ncl(x_ncl, P, cfg)
    ref_nlc = jnp.transpose(ref, (0, 2, 1))

    assert out_nlc.shape == ref_nlc.shape, (out_nlc.shape, ref_nlc.shape)
    max_err = float(jnp.max(jnp.abs(out_nlc - ref_nlc)))
    assert max_err < 2e-2, f"max abs error too large: {max_err}"

    print("KERNEL_OK")
</pallas_src>

<mosaic_0001>
module attributes {stable_mosaic.version = 11 : i64} {
  func.func @kernel(%arg0: i32, %arg1: memref<2x16x4xf32, #tpu.memory_space<vmem>>, %arg2: memref<4x16xf32, #tpu.memory_space<vmem>>, %arg3: memref<3x16xf32, #tpu.memory_space<vmem>>, %arg4: memref<16x4xf32, #tpu.memory_space<vmem>>, %arg5: memref<4x16xf32, #tpu.memory_space<vmem>>, %arg6: memref<16x8xf32, #tpu.memory_space<vmem>>, %arg7: memref<12x8xf32, #tpu.memory_space<vmem>>, %arg8: memref<4x16xf32, #tpu.memory_space<vmem>>, %arg9: memref<2x16x8xf32, #tpu.memory_space<vmem>>, %arg10: memref<2x18x16xf32, #tpu.memory_space<vmem>>, %arg11: memref<2x18x4xf32, #tpu.memory_space<vmem>>) attributes {dimension_semantics = [#tpu.dimension_semantics<parallel>], iteration_bounds = array<i64: 1>, scalar_prefetch = 0 : i64, scratch_operands = 2 : i64, tpu.core_type = #tpu.core_type<tc>, window_params = [{transform_indices = @transform_0, window_bounds = array<i64: 2, 16, 4>}, {pipeline_mode = #tpu.pipeline_mode<synchronous>, transform_indices = @transform_1, window_bounds = array<i64: 4, 16>}, {pipeline_mode = #tpu.pipeline_mode<synchronous>, transform_indices = @transform_2, window_bounds = array<i64: 3, 16>}, {pipeline_mode = #tpu.pipeline_mode<synchronous>, transform_indices = @transform_3, window_bounds = array<i64: 16, 4>}, {pipeline_mode = #tpu.pipeline_mode<synchronous>, transform_indices = @transform_4, window_bounds = array<i64: 4, 16>}, {pipeline_mode = #tpu.pipeline_mode<synchronous>, transform_indices = @transform_5, window_bounds = array<i64: 16, 8>}, {pipeline_mode = #tpu.pipeline_mode<synchronous>, transform_indices = @transform_6, window_bounds = array<i64: 12, 8>}, {pipeline_mode = #tpu.pipeline_mode<synchronous>, transform_indices = @transform_7, window_bounds = array<i64: 4, 16>}, {transform_indices = @transform_8, window_bounds = array<i64: 2, 16, 8>}]} {
    %c0 = arith.constant 0 : index
    %c0_0 = arith.constant 0 : index
    %c0_1 = arith.constant 0 : index
    %0 = vector.load %arg1[%c0, %c0_0, %c0_1] : memref<2x16x4xf32, #tpu.memory_space<vmem>>, vector<2x16x4xf32>
    %c0_2 = arith.constant 0 : index
    %c0_3 = arith.constant 0 : index
    %1 = vector.load %arg2[%c0_2, %c0_3] : memref<4x16xf32, #tpu.memory_space<vmem>>, vector<4x16xf32>
    %c0_4 = arith.constant 0 : index
    %c0_5 = arith.constant 0 : index
    %2 = vector.load %arg3[%c0_4, %c0_5] : memref<3x16xf32, #tpu.memory_space<vmem>>, vector<3x16xf32>
    %c0_6 = arith.constant 0 : index
    %c0_7 = arith.constant 0 : index
    %3 = vector.load %arg4[%c0_6, %c0_7] : memref<16x4xf32, #tpu.memory_space<vmem>>, vector<16x4xf32>
    %c0_8 = arith.constant 0 : index
    %c0_9 = arith.constant 0 : index
    %4 = vector.load %arg5[%c0_8, %c0_9] : memref<4x16xf32, #tpu.memory_space<vmem>>, vector<4x16xf32>
    %c0_10 = arith.constant 0 : index
    %c0_11 = arith.constant 0 : index
    %5 = vector.load %arg6[%c0_10, %c0_11] : memref<16x8xf32, #tpu.memory_space<vmem>>, vector<16x8xf32>
    %c0_12 = arith.constant 0 : index
    %c0_13 = arith.constant 0 : index
    %6 = vector.load %arg7[%c0_12, %c0_13] : memref<12x8xf32, #tpu.memory_space<vmem>>, vector<12x8xf32>
    %c0_14 = arith.constant 0 : index
    %c0_15 = arith.constant 0 : index
    %7 = vector.load %arg8[%c0_14, %c0_15] : memref<4x16xf32, #tpu.memory_space<vmem>>, vector<4x16xf32>
    %8 = vector.extract_strided_slice %7 {offsets = [0, 0], sizes = [1, 16], strides = [1, 1]} : vector<4x16xf32> to vector<1x16xf32>
    %9 = vector.extract_strided_slice %7 {offsets = [1, 0], sizes = [1, 16], strides = [1, 1]} : vector<4x16xf32> to vector<1x16xf32>
    %10 = vector.shape_cast %9 : vector<1x16xf32> to vector<1x1x16xf32>
    %11 = vector.extract_strided_slice %7 {offsets = [2, 0], sizes = [1, 8], strides = [1, 1]} : vector<4x16xf32> to vector<1x8xf32>
    %12 = vector.extract_strided_slice %7 {offsets = [3, 0], sizes = [1, 8], strides = [1, 1]} : vector<4x16xf32> to vector<1x8xf32>
    %13 = vector.shape_cast %0 : vector<2x16x4xf32> to vector<32x4xf32>
    %cst = arith.constant dense<0.000000e+00> : vector<32x16xf32>
    %14 = tpu.matmul %13, %1, %cst {dimension_numbers = #tpu.dot_dimension_numbers<[1], [0], [0], [1], [0, 0, 1, 1], [], []>} : vector<32x4xf32>, vector<4x16xf32>, vector<32x16xf32> -> vector<32x16xf32>
    %15 = vector.broadcast %8 : vector<1x16xf32> to vector<32x16xf32>
    %16 = arith.addf %14, %15 : vector<32x16xf32>
    %17 = arith.negf %16 : vector<32x16xf32>
    %18 = math.exp %17 : vector<32x16xf32>
    %cst_16 = arith.constant 1.000000e+00 : f32
    %19 = vector.broadcast %cst_16 : f32 to vector<32x16xf32>
    %20 = arith.addf %19, %18 : vector<32x16xf32>
    %21 = arith.divf %19, %20 : vector<32x16xf32>
    %22 = arith.mulf %16, %21 : vector<32x16xf32>
    %23 = vector.shape_cast %22 : vector<32x16xf32> to vector<2x16x16xf32>
    %cst_17 = arith.constant 0.000000e+00 : f32
    %24 = vector.broadcast %cst_17 : f32 to vector<2x1x16xf32>
    %c0_18 = arith.constant 0 : index
    %c0_19 = arith.constant 0 : index
    %c0_20 = arith.constant 0 : index
    %25 = vector.load %arg10[%c0_18, %c0_19, %c0_20] : memref<2x18x16xf32, #tpu.memory_space<vmem>>, vector<2x1x16xf32>
    tpu.vector_store %arg10[%c0_18, %c0_19, %c0_20], %24 {strides = array<i32>} : memref<2x18x16xf32, #tpu.memory_space<vmem>>, vector<2x1x16xf32>,
    %c0_21 = arith.constant 0 : index
    %c17 = arith.constant 17 : index
    %c0_22 = arith.constant 0 : index
    %26 = vector.load %arg10[%c0_21, %c17, %c0_22] : memref<2x18x16xf32, #tpu.memory_space<vmem>>, vector<2x1x16xf32>
    tpu.vector_store %arg10[%c0_21, %c17, %c0_22], %24 {strides = array<i32>} : memref<2x18x16xf32, #tpu.memory_space<vmem>>, vector<2x1x16xf32>,
    %c0_23 = arith.constant 0 : index
    %c1 = arith.constant 1 : index
    %c0_24 = arith.constant 0 : index
    %27 = vector.load %arg10[%c0_23, %c1, %c0_24] : memref<2x18x16xf32, #tpu.memory_space<vmem>>, vector<2x16x16xf32>
    tpu.vector_store %arg10[%c0_23, %c1, %c0_24], %23 {strides = array<i32>} : memref<2x18x16xf32, #tpu.memory_space<vmem>>, vector<2x16x16xf32>,
    %c0_25 = arith.constant 0 : index
    %c0_26 = arith.constant 0 : index
    %c0_27 = arith.constant 0 : index
    %28 = vector.load %arg10[%c0_25, %c0_26, %c0_27] : memref<2x18x16xf32, #tpu.memory_space<vmem>>, vector<2x16x16xf32>
    %c0_28 = arith.constant 0 : index
    %c1_29 = arith.constant 1 : index
    %c0_30 = arith.constant 0 : index
    %29 = vector.load %arg10[%c0_28, %c1_29, %c0_30] : memref<2x18x16xf32, #tpu.memory_space<vmem>>, vector<2x16x16xf32>
    %c0_31 = arith.constant 0 : index
    %c2 = arith.constant 2 : index
    %c0_32 = arith.constant 0 : index
    %30 = vector.load %arg10[%c0_31, %c2, %c0_32] : memref<2x18x16xf32, #tpu.memory_space<vmem>>, vector<2x16x16xf32>
    %31 = vector.extract_strided_slice %2 {offsets = [0, 0], sizes = [1, 16], strides = [1, 1]} : vector<3x16xf32> to vector<1x16xf32>
    %32 = vector.shape_cast %31 : vector<1x16xf32> to vector<1x1x16xf32>
    %33 = vector.broadcast %32 : vector<1x1x16xf32> to vector<2x16x16xf32>
    %34 = arith.mulf %28, %33 : vector<2x16x16xf32>
    %35 = vector.extract_strided_slice %2 {offsets = [1, 0], sizes = [1, 16], strides = [1, 1]} : vector<3x16xf32> to vector<1x16xf32>
    %36 = vector.shape_cast %35 : vector<1x16xf32> to vector<1x1x16xf32>
    %37 = vector.broadcast %36 : vector<1x1x16xf32> to vector<2x16x16xf32>
    %38 = arith.mulf %29, %37 : vector<2x16x16xf32>
    %39 = arith.addf %34, %38 : vector<2x16x16xf32>
    %40 = vector.extract_strided_slice %2 {offsets = [2, 0], sizes = [1, 16], strides = [1, 1]} : vector<3x16xf32> to vector<1x16xf32>
    %41 = vector.shape_cast %40 : vector<1x16xf32> to vector<1x1x16xf32>
    %42 = vector.broadcast %41 : vector<1x1x16xf32> to vector<2x16x16xf32>
    %43 = arith.mulf %30, %42 : vector<2x16x16xf32>
    %44 = arith.addf %39, %43 : vector<2x16x16xf32>
    %45 = vector.broadcast %10 : vector<1x1x16xf32> to vector<2x16x16xf32>
    %46 = arith.addf %44, %45 : vector<2x16x16xf32>
    %47 = arith.negf %46 : vector<2x16x16xf32>
    %48 = math.exp %47 : vector<2x16x16xf32>
    %cst_33 = arith.constant 1.000000e+00 : f32
    %49 = vector.broadcast %cst_33 : f32 to vector<2x16x16xf32>
    %50 = arith.addf %49, %48 : vector<2x16x16xf32>
    %51 = arith.divf %49, %50 : vector<2x16x16xf32>
    %52 = arith.mulf %46, %51 : vector<2x16x16xf32>
    %cst_34 = arith.constant dense<0.000000e+00> : vector<2x16xf32>
    %53 = vector.multi_reduction <add>, %52, %cst_34 [1] : vector<2x16x16xf32> to vector<2x16xf32>
    %cst_35 = arith.constant 1.600000e+01 : f32
    %54 = vector.broadcast %cst_35 : f32 to vector<2x16xf32>
    %55 = arith.divf %53, %54 : vector<2x16xf32>
    %cst_36 = arith.constant dense<0.000000e+00> : vector<2x4xf32>
    %56 = tpu.matmul %55, %3, %cst_36 {dimension_numbers = #tpu.dot_dimension_numbers<[1], [0], [0], [1], [0, 0, 1, 1], [], []>} : vector<2x16xf32>, vector<16x4xf32>, vector<2x4xf32> -> vector<2x4xf32>
    %57 = arith.negf %56 : vector<2x4xf32>
    %58 = math.exp %57 : vector<2x4xf32>
    %cst_37 = arith.constant 1.000000e+00 : f32
    %59 = vector.broadcast %cst_37 : f32 to vector<2x4xf32>
    %60 = arith.addf %59, %58 : vector<2x4xf32>
    %61 = arith.divf %59, %60 : vector<2x4xf32>
    %62 = arith.mulf %56, %61 : vector<2x4xf32>
    %cst_38 = arith.constant dense<0.000000e+00> : vector<2x16xf32>
    %63 = tpu.matmul %62, %4, %cst_38 {dimension_numbers = #tpu.dot_dimension_numbers<[1], [0], [0], [1], [0, 0, 1, 1], [], []>} : vector<2x4xf32>, vector<4x16xf32>, vector<2x16xf32> -> vector<2x16xf32>
    %64 = arith.negf %63 : vector<2x16xf32>
    %65 = math.exp %64 : vector<2x16xf32>
    %cst_39 = arith.constant 1.000000e+00 : f32
    %66 = vector.broadcast %cst_39 : f32 to vector<2x16xf32>
    %67 = arith.addf %66, %65 : vector<2x16xf32>
    %68 = arith.divf %66, %67 : vector<2x16xf32>
    %69 = vector.shape_cast %68 : vector<2x16xf32> to vector<2x1x16xf32>
    %70 = vector.broadcast %69 : vector<2x1x16xf32> to vector<2x16x16xf32>
    %71 = arith.mulf %52, %70 : vector<2x16x16xf32>
    %72 = vector.shape_cast %71 : vector<2x16x16xf32> to vector<32x16xf32>
    %cst_40 = arith.constant dense<0.000000e+00> : vector<32x8xf32>
    %73 = tpu.matmul %72, %5, %cst_40 {dimension_numbers = #tpu.dot_dimension_numbers<[1], [0], [0], [1], [0, 0, 1, 1], [], []>} : vector<32x16xf32>, vector<16x8xf32>, vector<32x8xf32> -> vector<32x8xf32>
    %74 = vector.broadcast %11 : vector<1x8xf32> to vector<32x8xf32>
    %75 = arith.addf %73, %74 : vector<32x8xf32>
    %76 = arith.negf %75 : vector<32x8xf32>
    %77 = math.exp %76 : vector<32x8xf32>
    %cst_41 = arith.constant 1.000000e+00 : f32
    %78 = vector.broadcast %cst_41 : f32 to vector<32x8xf32>
    %79 = arith.addf %78, %77 : vector<32x8xf32>
    %80 = arith.divf %78, %79 : vector<32x8xf32>
    %81 = arith.mulf %75, %80 : vector<32x8xf32>
    %82 = vector.shape_cast %81 : vector<32x8xf32> to vector<2x16x8xf32>
    %cst_42 = arith.constant 0.000000e+00 : f32
    %83 = vector.broadcast %cst_42 : f32 to vector<2x1x4xf32>
    %c0_43 = arith.constant 0 : index
    %c0_44 = arith.constant 0 : index
    %c0_45 = arith.constant 0 : index
    %84 = vector.load %arg11[%c0_43, %c0_44, %c0_45] : memref<2x18x4xf32, #tpu.memory_space<vmem>>, vector<2x1x4xf32>
    tpu.vector_store %arg11[%c0_43, %c0_44, %c0_45], %83 {strides = array<i32>} : memref<2x18x4xf32, #tpu.memory_space<vmem>>, vector<2x1x4xf32>,
    %c0_46 = arith.constant 0 : index
    %c17_47 = arith.constant 17 : index
    %c0_48 = arith.constant 0 : index
    %85 = vector.load %arg11[%c0_46, %c17_47, %c0_48] : memref<2x18x4xf32, #tpu.memory_space<vmem>>, vector<2x1x4xf32>
    tpu.vector_store %arg11[%c0_46, %c17_47, %c0_48], %83 {strides = array<i32>} : memref<2x18x4xf32, #tpu.memory_space<vmem>>, vector<2x1x4xf32>,
    %c0_49 = arith.constant 0 : index
    %c1_50 = arith.constant 1 : index
    %c0_51 = arith.constant 0 : index
    %86 = vector.load %arg11[%c0_49, %c1_50, %c0_51] : memref<2x18x4xf32, #tpu.memory_space<vmem>>, vector<2x16x4xf32>
    tpu.vector_store %arg11[%c0_49, %c1_50, %c0_51], %0 {strides = array<i32>} : memref<2x18x4xf32, #tpu.memory_space<vmem>>, vector<2x16x4xf32>,
    %c0_52 = arith.constant 0 : index
    %c0_53 = arith.constant 0 : index
    %c0_54 = arith.constant 0 : index
    %87 = vector.load %arg11[%c0_52, %c0_53, %c0_54] : memref<2x18x4xf32, #tpu.memory_space<vmem>>, vector<2x16x4xf32>
    %c0_55 = arith.constant 0 : index
    %c1_56 = arith.constant 1 : index
    %c0_57 = arith.constant 0 : index
    %88 = vector.load %arg11[%c0_55, %c1_56, %c0_57] : memref<2x18x4xf32, #tpu.memory_space<vmem>>, vector<2x16x4xf32>
    %c0_58 = arith.constant 0 : index
    %c2_59 = arith.constant 2 : index
    %c0_60 = arith.constant 0 : index
    %89 = vector.load %arg11[%c0_58, %c2_59, %c0_60] : memref<2x18x4xf32, #tpu.memory_space<vmem>>, vector<2x16x4xf32>
    %90 = tpu.concatenate %87, %88, %89 in 2 : vector<2x16x4xf32>, vector<2x16x4xf32>, vector<2x16x4xf32> -> vector<2x16x12xf32>
    %91 = vector.shape_cast %90 : vector<2x16x12xf32> to vector<32x12xf32>
    %cst_61 = arith.constant dense<0.000000e+00> : vector<32x8xf32>
    %92 = tpu.matmul %91, %6, %cst_61 {dimension_numbers = #tpu.dot_dimension_numbers<[1], [0], [0], [1], [0, 0, 1, 1], [], []>} : vector<32x12xf32>, vector<12x8xf32>, vector<32x8xf32> -> vector<32x8xf32>
    %93 = vector.broadcast %12 : vector<1x8xf32> to vector<32x8xf32>
    %94 = arith.addf %92, %93 : vector<32x8xf32>
    %95 = arith.negf %94 : vector<32x8xf32>
    %96 = math.exp %95 : vector<32x8xf32>
    %cst_62 = arith.constant 1.000000e+00 : f32
    %97 = vector.broadcast %cst_62 : f32 to vector<32x8xf32>
    %98 = arith.addf %97, %96 : vector<32x8xf32>
    %99 = arith.divf %97, %98 : vector<32x8xf32>
    %100 = arith.mulf %94, %99 : vector<32x8xf32>
    %101 = vector.shape_cast %100 : vector<32x8xf32> to vector<2x16x8xf32>
    %102 = arith.addf %82, %101 : vector<2x16x8xf32>
    %c0_63 = arith.constant 0 : index
    %c0_64 = arith.constant 0 : index
    %c0_65 = arith.constant 0 : index
    %103 = vector.load %arg9[%c0_63, %c0_64, %c0_65] : memref<2x16x8xf32, #tpu.memory_space<vmem>>, vector<2x16x8xf32>
    tpu.vector_store %arg9[%c0_63, %c0_64, %c0_65], %102 {strides = array<i32>} : memref<2x16x8xf32, #tpu.memory_space<vmem>>, vector<2x16x8xf32>,
    return
  }
  func.func @transform_0(%arg0: i32) -> (i32, i32, i32) {
    %c0_i32 = arith.constant 0 : i32
    %c0_i32_0 = arith.constant 0 : i32
    %c0_i32_1 = arith.constant 0 : i32
    return %arg0, %c0_i32, %c0_i32_0 : i32, i32, i32
  }
  func.func @transform_1(%arg0: i32) -> (i32, i32) {
    %c0_i32 = arith.constant 0 : i32
    %c0_i32_0 = arith.constant 0 : i32
    %c0_i32_1 = arith.constant 0 : i32
    return %c0_i32, %c0_i32_0 : i32, i32
  }
  func.func @transform_2(%arg0: i32) -> (i32, i32) {
    %c0_i32 = arith.constant 0 : i32
    %c0_i32_0 = arith.constant 0 : i32
    %c0_i32_1 = arith.constant 0 : i32
    return %c0_i32, %c0_i32_0 : i32, i32
  }
  func.func @transform_3(%arg0: i32) -> (i32, i32) {
    %c0_i32 = arith.constant 0 : i32
    %c0_i32_0 = arith.constant 0 : i32
    %c0_i32_1 = arith.constant 0 : i32
    return %c0_i32, %c0_i32_0 : i32, i32
  }
  func.func @transform_4(%arg0: i32) -> (i32, i32) {
    %c0_i32 = arith.constant 0 : i32
    %c0_i32_0 = arith.constant 0 : i32
    %c0_i32_1 = arith.constant 0 : i32
    return %c0_i32, %c0_i32_0 : i32, i32
  }
  func.func @transform_5(%arg0: i32) -> (i32, i32) {
    %c0_i32 = arith.constant 0 : i32
    %c0_i32_0 = arith.constant 0 : i32
    %c0_i32_1 = arith.constant 0 : i32
    return %c0_i32, %c0_i32_0 : i32, i32
  }
  func.func @transform_6(%arg0: i32) -> (i32, i32) {
    %c0_i32 = arith.constant 0 : i32
    %c0_i32_0 = arith.constant 0 : i32
    %c0_i32_1 = arith.constant 0 : i32
    return %c0_i32, %c0_i32_0 : i32, i32
  }
  func.func @transform_7(%arg0: i32) -> (i32, i32) {
    %c0_i32 = arith.constant 0 : i32
    %c0_i32_0 = arith.constant 0 : i32
    %c0_i32_1 = arith.constant 0 : i32
    return %c0_i32, %c0_i32_0 : i32, i32
  }
  func.func @transform_8(%arg0: i32) -> (i32, i32, i32) {
    %c0_i32 = arith.constant 0 : i32
    %c0_i32_0 = arith.constant 0 : i32
    %c0_i32_1 = arith.constant 0 : i32
    return %arg0, %c0_i32, %c0_i32_0 : i32, i32, i32
  }
}

</mosaic_0001>

<llo_original>
// kernel: tpu_custom_call.1
$region0: #{tpu_custom_call.1}
  #allocation0 [shape = 'u32[]', space=smem, size = 0x4, offset = 0x4, fixed_abs, tag = 'smem constant byte address 0x4 - core index']
  #allocation1 [shape = 'u32[144,128]{1,0:T(1,128)}', space=vmem, size = 0x12000, scoped, tag = 'internal scratch']
  #allocation2 [shape = 'f32[2,18,16]{2,1,0:T(8,128)}', space=vmem, size = 0x6000, scoped, tag = 'scratch operand']
  #allocation3 [shape = 'f32[2,18,4]{2,1,0:T(8,128)}', space=vmem, size = 0x6000, scoped, tag = 'scratch operand']
  %s0 = inlined_call_operand.vmem [shape: f32[2,16,4], index: 0, kind: input, shape index: {}]
  %s1 = inlined_call_operand.vmem [shape: f32[4,16], index: 1, kind: input, shape index: {}]
  %s2 = inlined_call_operand.vmem [shape: f32[3,16], index: 2, kind: input, shape index: {}]
  %s3 = inlined_call_operand.vmem [shape: f32[16,4], index: 3, kind: input, shape index: {}]
  %s4 = inlined_call_operand.vmem [shape: f32[4,16], index: 4, kind: input, shape index: {}]
  %s5 = inlined_call_operand.vmem [shape: f32[16,8], index: 5, kind: input, shape index: {}]
  %s6 = inlined_call_operand.vmem [shape: f32[12,8], index: 6, kind: input, shape index: {}]
  %s7 = inlined_call_operand.vmem [shape: f32[4,16], index: 7, kind: input, shape index: {}]
  %s8 = inlined_call_operand.vmem [shape: f32[2,16,8], index: 8, kind: output, shape index: {}]
  %s9 = sld [smem:[#allocation0]]
  $region42: #{tpu_custom_call.1} parent=0
    _
  %s11 = ssub.s32 1, %s9
  %s12 = scalar_select 0, %s11, %s9
  // Predicated region
  $region2: #{tpu_custom_call.1} parent=0 // pred_check
    _
  $region3: #{tpu_custom_call.1} parent=0 // pred_check_branch
    %14 = sbr.rel (0) target = $region5
  $region4: #{tpu_custom_call.1} parent=0 // pred_region
    _
  $region5: #{tpu_custom_call.1} parent=0 // pred_fallthru
    _
  // Predicated region
  $region6: #{tpu_custom_call.1} parent=0 // pred_check
    _
  $region7: #{tpu_custom_call.1} parent=0 // pred_check_branch
    %16 = sbr.rel (0) target = $region9
  $region8: #{tpu_custom_call.1} parent=0 // pred_region
    _
  $region9: #{tpu_custom_call.1} parent=0 // pred_fallthru
    _
  // Predicated region
  $region10: #{tpu_custom_call.1} parent=0 // pred_check
    _
  $region11: #{tpu_custom_call.1} parent=0 // pred_check_branch
    %18 = sbr.rel (0) target = $region13
  $region12: #{tpu_custom_call.1} parent=0 // pred_region
    _
  $region13: #{tpu_custom_call.1} parent=0 // pred_fallthru
    _
  // Predicated region
  $region14: #{tpu_custom_call.1} parent=0 // pred_check
    _
  $region15: #{tpu_custom_call.1} parent=0 // pred_check_branch
    %20 = sbr.rel (0) target = $region17
  $region16: #{tpu_custom_call.1} parent=0 // pred_region
    _
  $region17: #{tpu_custom_call.1} parent=0 // pred_fallthru
    _
  // Predicated region
  $region18: #{tpu_custom_call.1} parent=0 // pred_check
    _
  $region19: #{tpu_custom_call.1} parent=0 // pred_check_branch
    %22 = sbr.rel (0) target = $region21
  $region20: #{tpu_custom_call.1} parent=0 // pred_region
    _
  $region21: #{tpu_custom_call.1} parent=0 // pred_fallthru
    _
  // Predicated region
  $region22: #{tpu_custom_call.1} parent=0 // pred_check
    _
  $region23: #{tpu_custom_call.1} parent=0 // pred_check_branch
    %24 = sbr.rel (0) target = $region25
  $region24: #{tpu_custom_call.1} parent=0 // pred_region
    _
  $region25: #{tpu_custom_call.1} parent=0 // pred_fallthru
    _
  // Predicated region
  $region26: #{tpu_custom_call.1} parent=0 // pred_check
    _
  $region27: #{tpu_custom_call.1} parent=0 // pred_check_branch
    %26 = sbr.rel (0) target = $region29
  $region28: #{tpu_custom_call.1} parent=0 // pred_region
    _
  $region29: #{tpu_custom_call.1} parent=0 // pred_fallthru
    _
  // Predicated region
  $region30: #{tpu_custom_call.1} parent=0 // pred_check
    _
  $region31: #{tpu_custom_call.1} parent=0 // pred_check_branch
    %28 = sbr.rel (0) target = $region33
  $region32: #{tpu_custom_call.1} parent=0 // pred_region
    _
  $region33: #{tpu_custom_call.1} parent=0 // pred_fallthru
    _
  %v29 = vld [vmem:[%s0] sm:$0xff]
  %v30 = vld [vmem:[%s0 + $0x8] sm:$0xff]
  %v31 = vld [vmem:[%s0 + $0x10] sm:$0xff]
  %v32 = vld [vmem:[%s0 + $0x18] sm:$0xff]
  %v33 = vld [vmem:[%s1] sm:$0xf]
  %v34 = vld [vmem:[%s2] sm:$0x7]
  %v35 = vld [vmem:[%s3] sm:$0xff]
  %v36 = vld [vmem:[%s3 + $0x8] sm:$0xff]
  %v37 = vld [vmem:[%s4] sm:$0xf]
  %v38 = vld [vmem:[%s5] sm:$0xff]
  %v39 = vld [vmem:[%s5 + $0x8] sm:$0xff]
  %v40 = vld [vmem:[%s6] sm:$0xff]
  %v41 = vld [vmem:[%s6 + $0x8] sm:$0xf]
  %v42 = vld [vmem:[%s7] sm:$0xf]
  %v43 = vlaneseq
  %v44 = vshrl.u32 %v43, 7
  %v45 = vsub.s32 0, %v44
  %v46 = vrot.slane %v42, %v45
  %vm47 = vcmask 31744
  %v49 = vsel %vm47, %v29, 0
  %v52 = vsel %vm47, %v30, 0
  %v55 = vsel %vm47, %v31, 0
  %v58 = vsel %vm47, %v32, 0
  %vm60 = vcmask 1043456
  %v62 = vsel %vm60, %v33, 0
  %64 = vmatprep.subr.mxu0 0.0
  %65 = vmatpush1.msra.mxu0 %v62
  %66 = vmatprep.subr.mxu0 0.0
  %67 = vmatpush1.msra.mxu0 0.0
  %68 = vmatprep.subr.mxu0 0.0
  %69 = vmatpush1.msra.mxu0 0.0
  %70 = vmatprep.subr.mxu0 0.0
  %71 = vmatpush1.msra.mxu0 0.0
  %72 = vmatprep.subr.mxu0 0.0
  %73 = vmatpush1.msra.mxu0 0.0
  %74 = vmatprep.subr.mxu0 0.0
  %75 = vmatpush1.msra.mxu0 0.0
  %76 = vmatprep.subr.mxu0 0.0
  %77 = vmatpush1.msra.mxu0 0.0
  %78 = vmatprep.subr.mxu0 0.0
  %79 = vmatpush1.msra.mxu0 0.0
  %80 = vmatprep.subr.mxu0 0.0
  %81 = vmatpush1.msra.mxu0 0.0
  %82 = vmatprep.subr.mxu0 0.0
  %83 = vmatpush1.msra.mxu0 0.0
  %84 = vmatprep.subr.mxu0 0.0
  %85 = vmatpush1.msra.mxu0 0.0
  %86 = vmatprep.subr.mxu0 0.0
  %87 = vmatpush1.msra.mxu0 0.0
  %88 = vmatprep.subr.mxu0 0.0
  %89 = vmatpush1.msra.mxu0 0.0
  %90 = vmatprep.subr.mxu0 0.0
  %91 = vmatpush1.msra.mxu0 0.0
  %92 = vmatprep.subr.mxu0 0.0
  %93 = vmatpush1.msra.mxu0 0.0
  %94 = vmatprep.subr.mxu0 0.0
  %95 = vmatpush1.msra.mxu0 0.0
  %96 = vmatprep.subr.mxu0 0.0
  %97 = vmatpush1.msra.mxu0 0.0
  %98 = vmatprep.subr.mxu0 0.0
  %99 = vmatpush1.msra.mxu0 0.0
  %100 = vmatprep.subr.mxu0 0.0
  %101 = vmatpush1.msra.mxu0 0.0
  %102 = vmatprep.subr.mxu0 0.0
  %103 = vmatpush1.msra.mxu0 0.0
  %104 = vmatprep.subr.mxu0 0.0
  %105 = vmatpush1.msra.mxu0 0.0
  %106 = vmatprep.subr.mxu0 0.0
  %107 = vmatpush1.msra.mxu0 0.0
  %108 = vmatprep.subr.mxu0 0.0
  %109 = vmatpush1.msra.mxu0 0.0
  %110 = vmatprep.subr.mxu0 0.0
  %111 = vmatpush1.msra.mxu0 0.0
  %112 = vmatprep.subr.mxu0 0.0
  %113 = vmatpush1.msra.mxu0 0.0
  %114 = vmatprep.subr.mxu0 0.0
  %115 = vmatpush1.msra.mxu0 0.0
  %116 = vmatprep.subr.mxu0 0.0
  %117 = vmatpush1.msra.mxu0 0.0
  %118 = vmatprep.subr.mxu0 0.0
  %119 = vmatpush1.msra.mxu0 0.0
  %120 = vmatprep.subr.mxu0 0.0
  %121 = vmatpush1.msra.mxu0 0.0
  %122 = vmatprep.subr.mxu0 0.0
  %123 = vmatpush1.msra.mxu0 0.0
  %124 = vmatprep.subr.mxu0 0.0
  %125 = vmatpush1.msra.mxu0 0.0
  %126 = vmatprep.subr.mxu0 0.0
  %127 = vmatpush1.msra.mxu0 0.0
  %128 = vmatprep.mubr.f32.mxu0 0.0
  %129 = vmatmul.mubr.f32.gmra.mrb[0].mxu0 %v49
  %v130 = vpop.f32.mrb[0].mxu0
  %v131 = vadd.f32 %v46, %v130
  %v132 = vpop.f32.mrb[0].mxu0
  %133 = vmatprep.mubr.f32.mxu0 0.0
  %134 = vmatmul.mubr.f32.gmra.mrb[0].mxu0 %v52
  %v135 = vpop.f32.mrb[0].mxu0
  %v136 = vadd.f32 %v46, %v135
  %v137 = vpop.f32.mrb[0].mxu0
  %138 = vmatprep.mubr.f32.mxu0 0.0
  %139 = vmatmul.mubr.f32.gmra.mrb[0].mxu0 %v55
  %v140 = vpop.f32.mrb[0].mxu0
  %v141 = vadd.f32 %v46, %v140
  %v142 = vpop.f32.mrb[0].mxu0
  %143 = vmatprep.mubr.f32.mxu0 0.0
  %144 = vmatmul.mubr.f32.gmra.mrb[0].mxu0 %v58
  %v145 = vpop.f32.mrb[0].mxu0
  %v146 = vadd.f32 %v46, %v145
  %v147 = vpop.f32.mrb[0].mxu0
  %148 = vdwg.mxu0
  %v149 = vxor.u32 %v131, 2147483648
  %v150 = vxor.u32 %v136, 2147483648
  %v151 = vxor.u32 %v141, 2147483648
  %v152 = vxor.u32 %v146, 2147483648
  %v153 = vmul.f32 %v149, 1.442695
  %v154 = vpow.pop %v153
  %v155 = vmul.f32 %v150, 1.442695
  %v156 = vpow.pop %v155
  %v157 = vmul.f32 %v151, 1.442695
  %v158 = vpow.pop %v157
  %v159 = vmul.f32 %v152, 1.442695
  %v160 = vpow.pop %v159
  %v161 = vadd.f32 %v154, 1.0
  %v162 = vadd.f32 %v156, 1.0
  %v163 = vadd.f32 %v158, 1.0
  %v164 = vadd.f32 %v160, 1.0
  %v165 = vrcp.pop %v161
  %v166 = vmul.f32 1.0, %v165
  %v167 = vrcp.pop %v162
  %v168 = vmul.f32 1.0, %v167
  %v169 = vrcp.pop %v163
  %v170 = vmul.f32 1.0, %v169
  %v171 = vrcp.pop %v164
  %v172 = vmul.f32 1.0, %v171
  %v173 = vmul.f32 %v131, %v166
  %v174 = vmul.f32 %v136, %v168
  %v175 = vmul.f32 %v141, %v170
  %v176 = vmul.f32 %v146, %v172
  %vm177 = vcmask 122880
  %178 = vst.msk [vmem:[#allocation2] sm:$0x1] %vm177, 0.0
  %179 = vst.msk [vmem:[#allocation2 + $0x18] sm:$0x1] %vm177, 0.0
  %180 = vst.msk [vmem:[#allocation2 + $0x11] sm:$0x1] %vm177, 0.0
  %181 = vst.msk [vmem:[#allocation2 + $0x29] sm:$0x1] %vm177, 0.0
  %vm182 = vcmask 130048
  %183 = vst.msk [vmem:[#allocation2 + $0x1] sm:$0xff] %vm182, %v173
  %184 = vst.msk [vmem:[#allocation2 + $0x9] sm:$0xff] %vm182, %v174
  %185 = vst.msk [vmem:[#allocation2 + $0x19] sm:$0xff] %vm182, %v175
  %186 = vst.msk [vmem:[#allocation2 + $0x21] sm:$0xff] %vm182, %v176
  %v187 = vld [vmem:[#allocation2] sm:$0xff]
  %v188 = vld [vmem:[#allocation2 + $0x8] sm:$0xff]
  %v189 = vld [vmem:[#allocation2 + $0x18] sm:$0xff]
  %v190 = vld [vmem:[#allocation2 + $0x20] sm:$0xff]
  %v191 = vld [vmem:[#allocation2 + $0x1] sm:$0xff]
  %v192 = vld [vmem:[#allocation2 + $0x9] sm:$0xff]
  %v193 = vld [vmem:[#allocation2 + $0x19] sm:$0xff]
  %v194 = vld [vmem:[#allocation2 + $0x21] sm:$0xff]
  %v195 = vld [vmem:[#allocation2 + $0x2] sm:$0xff]
  %v196 = vld [vmem:[#allocation2 + $0xa] sm:$0xff]
  %v197 = vld [vmem:[#allocation2 + $0x1a] sm:$0xff]
  %v198 = vld [vmem:[#allocation2 + $0x22] sm:$0xff]
  %v199 = vlaneseq
  %v200 = vshrl.u32 %v199, 7
  %v201 = vsub.s32 0, %v200
  %v202 = vrot.slane %v34, %v201
  %v203 = vmul.f32 %v187, %v202
  %v204 = vmul.f32 %v188, %v202
  %v205 = vmul.f32 %v189, %v202
  %v206 = vmul.f32 %v190, %v202
  %v207 = vlaneseq
  %v208 = vshrl.u32 %v207, 7
  %v209 = vsub.s32 1, %v208
  %v210 = vrot.slane %v34, %v209
  %v211 = vmul.f32 %v191, %v210
  %v212 = vmul.f32 %v192, %v210
  %v213 = vmul.f32 %v193, %v210
  %v214 = vmul.f32 %v194, %v210
  %v215 = vadd.f32 %v203, %v211
  %v216 = vadd.f32 %v204, %v212
  %v217 = vadd.f32 %v205, %v213
  %v218 = vadd.f32 %v206, %v214
  %v219 = vlaneseq
  %v220 = vshrl.u32 %v219, 7
  %v221 = vsub.s32 2, %v220
  %v222 = vrot.slane %v34, %v221
  %v223 = vmul.f32 %v195, %v222
  %v224 = vmul.f32 %v196, %v222
  %v225 = vmul.f32 %v197, %v222
  %v226 = vmul.f32 %v198, %v222
  %v227 = vadd.f32 %v215, %v223
  %v228 = vadd.f32 %v216, %v224
  %v229 = vadd.f32 %v217, %v225
  %v230 = vadd.f32 %v218, %v226
  %v231 = vlaneseq
  %v232 = vshrl.u32 %v231, 7
  %v233 = vsub.s32 1, %v232
  %v234 = vrot.slane %v42, %v233
  %v235 = vadd.f32 %v227, %v234
  %v236 = vadd.f32 %v228, %v234
  %v237 = vadd.f32 %v229, %v234
  %v238 = vadd.f32 %v230, %v234
  %v239 = vxor.u32 %v235, 2147483648
  %v240 = vxor.u32 %v236, 2147483648
  %v241 = vxor.u32 %v237, 2147483648
  %v242 = vxor.u32 %v238, 2147483648
  %v243 = vmul.f32 %v239, 1.442695
  %v244 = vpow.pop %v243
  %v245 = vmul.f32 %v240, 1.442695
  %v246 = vpow.pop %v245
  %v247 = vmul.f32 %v241, 1.442695
  %v248 = vpow.pop %v247
  %v249 = vmul.f32 %v242, 1.442695
  %v250 = vpow.pop %v249
  %v251 = vadd.f32 %v244, 1.0
  %v252 = vadd.f32 %v246, 1.0
  %v253 = vadd.f32 %v248, 1.0
  %v254 = vadd.f32 %v250, 1.0
  %v255 = vrcp.pop %v251
  %v256 = vmul.f32 1.0, %v255
  %v257 = vrcp.pop %v252
  %v258 = vmul.f32 1.0, %v257
  %v259 = vrcp.pop %v253
  %v260 = vmul.f32 1.0, %v259
  %v261 = vrcp.pop %v254
  %v262 = vmul.f32 1.0, %v261
  %v263 = vmul.f32 %v235, %v256
  %v264 = vmul.f32 %v236, %v258
  %v265 = vmul.f32 %v237, %v260
  %v266 = vmul.f32 %v238, %v262
  %v267 = vsel %vm182, %v263, 0.0
  %v268 = vsel %vm182, %v264, 0.0
  %v269 = vadd.f32 %v267, %v268
  %v270 = vrot.slane %v269, 4
  %v271 = vadd.f32 %v269, %v270
  %v272 = vrot.slane %v271, 2
  %v273 = vadd.f32 %v271, %v272
  %v274 = vrot.slane %v273, 1
  %v275 = vadd.f32 %v273, %v274
  %v276 = vsel %vm182, %v265, 0.0
  %v277 = vsel %vm182, %v266, 0.0
  %v278 = vadd.f32 %v276, %v277
  %v279 = vrot.slane %v278, 4
  %v280 = vadd.f32 %v278, %v279
  %v281 = vrot.slane %v280, 2
  %v282 = vadd.f32 %v280, %v281
  %v283 = vrot.slane %v282, 1
  %v284 = vadd.f32 %v282, %v283
  %v285 = vrcp.pop 16.0
  %v286 = vmul.f32 %v275, %v285
  %v287 = vmul.f32 %v284, %v285
  %vm290 = vcmask 1041409
  %v291 = vsel %vm290, %v287, %v286
  %v292 = vsel %vm182, %v291, 0
  %294 = vmatprep.subr.mxu0 0.0
  %295 = vmatpush1.msra.mxu0 %v35
  %296 = vmatprep.subr.mxu0 0.0
  %297 = vmatpush1.msra.mxu0 %v36
  %298 = vmatprep.subr.mxu0 0.0
  %299 = vmatpush1.msra.mxu0 0.0
  %300 = vmatprep.subr.mxu0 0.0
  %301 = vmatpush1.msra.mxu0 0.0
  %302 = vmatprep.subr.mxu0 0.0
  %303 = vmatpush1.msra.mxu0 0.0
  %304 = vmatprep.subr.mxu0 0.0
  %305 = vmatpush1.msra.mxu0 0.0
  %306 = vmatprep.subr.mxu0 0.0
  %307 = vmatpush1.msra.mxu0 0.0
  %308 = vmatprep.subr.mxu0 0.0
  %309 = vmatpush1.msra.mxu0 0.0
  %310 = vmatprep.subr.mxu0 0.0
  %311 = vmatpush1.msra.mxu0 0.0
  %312 = vmatprep.subr.mxu0 0.0
  %313 = vmatpush1.msra.mxu0 0.0
  %314 = vmatprep.subr.mxu0 0.0
  %315 = vmatpush1.msra.mxu0 0.0
  %316 = vmatprep.subr.mxu0 0.0
  %317 = vmatpush1.msra.mxu0 0.0
  %318 = vmatprep.subr.mxu0 0.0
  %319 = vmatpush1.msra.mxu0 0.0
  %320 = vmatprep.subr.mxu0 0.0
  %321 = vmatpush1.msra.mxu0 0.0
  %322 = vmatprep.subr.mxu0 0.0
  %323 = vmatpush1.msra.mxu0 0.0
  %324 = vmatprep.subr.mxu0 0.0
  %325 = vmatpush1.msra.mxu0 0.0
  %326 = vmatprep.subr.mxu0 0.0
  %327 = vmatpush1.msra.mxu0 0.0
  %328 = vmatprep.subr.mxu0 0.0
  %329 = vmatpush1.msra.mxu0 0.0
  %330 = vmatprep.subr.mxu0 0.0
  %331 = vmatpush1.msra.mxu0 0.0
  %332 = vmatprep.subr.mxu0 0.0
  %333 = vmatpush1.msra.mxu0 0.0
  %334 = vmatprep.subr.mxu0 0.0
  %335 = vmatpush1.msra.mxu0 0.0
  %336 = vmatprep.subr.mxu0 0.0
  %337 = vmatpush1.msra.mxu0 0.0
  %338 = vmatprep.subr.mxu0 0.0
  %339 = vmatpush1.msra.mxu0 0.0
  %340 = vmatprep.subr.mxu0 0.0
  %341 = vmatpush1.msra.mxu0 0.0
  %342 = vmatprep.subr.mxu0 0.0
  %343 = vmatpush1.msra.mxu0 0.0
  %344 = vmatprep.subr.mxu0 0.0
  %345 = vmatpush1.msra.mxu0 0.0
  %346 = vmatprep.subr.mxu0 0.0
  %347 = vmatpush1.msra.mxu0 0.0
  %348 = vmatprep.subr.mxu0 0.0
  %349 = vmatpush1.msra.mxu0 0.0
  %350 = vmatprep.subr.mxu0 0.0
  %351 = vmatpush1.msra.mxu0 0.0
  %352 = vmatprep.subr.mxu0 0.0
  %353 = vmatpush1.msra.mxu0 0.0
  %354 = vmatprep.subr.mxu0 0.0
  %355 = vmatpush1.msra.mxu0 0.0
  %356 = vmatprep.subr.mxu0 0.0
  %357 = vmatpush1.msra.mxu0 0.0
  %358 = vmatprep.mubr.f32.mxu0 0.0
  %359 = vmatmul.mubr.f32.gmra.mrb[0].mxu0 %v292
  %v360 = vpop.f32.mrb[0].mxu0
  %v361 = vadd.f32 0.0, %v360
  %v362 = vpop.f32.mrb[0].mxu0
  %363 = vdwg.mxu0
  %v364 = vxor.u32 %v361, 2147483648
  %v365 = vmul.f32 %v364, 1.442695
  %v366 = vpow.pop %v365
  %v367 = vadd.f32 %v366, 1.0
  %v368 = vrcp.pop %v367
  %v369 = vmul.f32 1.0, %v368
  %v370 = vmul.f32 %v361, %v369
  %v372 = vsel %vm47, %v370, 0
  %v375 = vsel %vm60, %v37, 0
  %377 = vmatprep.subr.mxu0 0.0
  %378 = vmatpush1.msra.mxu0 %v375
  %379 = vmatprep.subr.mxu0 0.0
  %380 = vmatpush1.msra.mxu0 0.0
  %381 = vmatprep.subr.mxu0 0.0
  %382 = vmatpush1.msra.mxu0 0.0
  %383 = vmatprep.subr.mxu0 0.0
  %384 = vmatpush1.msra.mxu0 0.0
  %385 = vmatprep.subr.mxu0 0.0
  %386 = vmatpush1.msra.mxu0 0.0
  %387 = vmatprep.subr.mxu0 0.0
  %388 = vmatpush1.msra.mxu0 0.0
  %389 = vmatprep.subr.mxu0 0.0
  %390 = vmatpush1.msra.mxu0 0.0
  %391 = vmatprep.subr.mxu0 0.0
  %392 = vmatpush1.msra.mxu0 0.0
  %393 = vmatprep.subr.mxu0 0.0
  %394 = vmatpush1.msra.mxu0 0.0
  %395 = vmatprep.subr.mxu0 0.0
  %396 = vmatpush1.msra.mxu0 0.0
  %397 = vmatprep.subr.mxu0 0.0
  %398 = vmatpush1.msra.mxu0 0.0
  %399 = vmatprep.subr.mxu0 0.0
  %400 = vmatpush1.msra.mxu0 0.0
  %401 = vmatprep.subr.mxu0 0.0
  %402 = vmatpush1.msra.mxu0 0.0
  %403 = vmatprep.subr.mxu0 0.0
  %404 = vmatpush1.msra.mxu0 0.0
  %405 = vmatprep.subr.mxu0 0.0
  %406 = vmatpush1.msra.mxu0 0.0
  %407 = vmatprep.subr.mxu0 0.0
  %408 = vmatpush1.msra.mxu0 0.0
  %409 = vmatprep.subr.mxu0 0.0
  %410 = vmatpush1.msra.mxu0 0.0
  %411 = vmatprep.subr.mxu0 0.0
  %412 = vmatpush1.msra.mxu0 0.0
  %413 = vmatprep.subr.mxu0 0.0
  %414 = vmatpush1.msra.mxu0 0.0
  %415 = vmatprep.subr.mxu0 0.0
  %416 = vmatpush1.msra.mxu0 0.0
  %417 = vmatprep.subr.mxu0 0.0
  %418 = vmatpush1.msra.mxu0 0.0
  %419 = vmatprep.subr.mxu0 0.0
  %420 = vmatpush1.msra.mxu0 0.0
  %421 = vmatprep.subr.mxu0 0.0
  %422 = vmatpush1.msra.mxu0 0.0
  %423 = vmatprep.subr.mxu0 0.0
  %424 = vmatpush1.msra.mxu0 0.0
  %425 = vmatprep.subr.mxu0 0.0
  %426 = vmatpush1.msra.mxu0 0.0
  %427 = vmatprep.subr.mxu0 0.0
  %428 = vmatpush1.msra.mxu0 0.0
  %429 = vmatprep.subr.mxu0 0.0
  %430 = vmatpush1.msra.mxu0 0.0
  %431 = vmatprep.subr.mxu0 0.0
  %432 = vmatpush1.msra.mxu0 0.0
  %433 = vmatprep.subr.mxu0 0.0
  %434 = vmatpush1.msra.mxu0 0.0
  %435 = vmatprep.subr.mxu0 0.0
  %436 = vmatpush1.msra.mxu0 0.0
  %437 = vmatprep.subr.mxu0 0.0
  %438 = vmatpush1.msra.mxu0 0.0
  %439 = vmatprep.subr.mxu0 0.0
  %440 = vmatpush1.msra.mxu0 0.0
  %441 = vmatprep.mubr.f32.mxu0 0.0
  %442 = vmatmul.mubr.f32.gmra.mrb[0].mxu0 %v372
  %v443 = vpop.f32.mrb[0].mxu0
  %v444 = vadd.f32 0.0, %v443
  %v445 = vpop.f32.mrb[0].mxu0
  %446 = vdwg.mxu0
  %v447 = vxor.u32 %v444, 2147483648
  %v448 = vmul.f32 %v447, 1.442695
  %v449 = vpow.pop %v448
  %v450 = vadd.f32 %v449, 1.0
  %v451 = vrcp.pop %v450
  %v452 = vmul.f32 1.0, %v451
  %v455 = vunpack.c.l.s4 1966171168
  %v456 = vunpack.c.0.s8 %v455
  %v457 = vlaneseq
  %v458 = vshrl.u32 %v457, 7
  %v459 = vsub.s32 %v456, %v458
  %v460 = vrot.slane %v452, %v459
  %v461 = vcombine.high %v460, %v460
  %v463 = vunpack.c.l.s4 1966171168
  %v464 = vunpack.c.0.s8 %v463
  %v465 = vlaneseq
  %v466 = vshrl.u32 %v465, 7
  %v467 = vsub.s32 %v464, %v466
  %v468 = vrot.slane %v460, %v467
  %v470 = vunpack.c.l.s4 1966171168
  %v471 = vunpack.c.0.s8 %v470
  %v472 = vlaneseq
  %v473 = vshrl.u32 %v472, 7
  %v474 = vsub.s32 %v471, %v473
  %v475 = vrot.slane %v461, %v474
  %v476 = vlaneseq
  %v477 = vshrl.u32 %v476, 7
  %v478 = vsub.s32 0, %v477
  %v479 = vrot.slane %v468, %v478
  %v480 = vlaneseq
  %v481 = vshrl.u32 %v480, 7
  %v482 = vsub.s32 0, %v481
  %v483 = vrot.slane %v475, %v482
  %v486 = vmul.f32 %v263, %v479
  %v487 = vmul.f32 %v264, %v479
  %v488 = vmul.f32 %v265, %v483
  %v489 = vmul.f32 %v266, %v483
  %v490 = vlaneseq
  %v491 = vshrl.u32 %v490, 7
  %v492 = vsub.s32 2, %v491
  %v493 = vrot.slane %v42, %v492
  %v495 = vsel %vm182, %v486, 0
  %v498 = vsel %vm182, %v487, 0
  %v501 = vsel %vm182, %v488, 0
  %v504 = vsel %vm182, %v489, 0
  %506 = vmatprep.subr.mxu0 0.0
  %507 = vmatpush1.msra.mxu0 %v38
  %508 = vmatprep.subr.mxu0 0.0
  %509 = vmatpush1.msra.mxu0 %v39
  %510 = vmatprep.subr.mxu0 0.0
  %511 = vmatpush1.msra.mxu0 0.0
  %512 = vmatprep.subr.mxu0 0.0
  %513 = vmatpush1.msra.mxu0 0.0
  %514 = vmatprep.subr.mxu0 0.0
  %515 = vmatpush1.msra.mxu0 0.0
  %516 = vmatprep.subr.mxu0 0.0
  %517 = vmatpush1.msra.mxu0 0.0
  %518 = vmatprep.subr.mxu0 0.0
  %519 = vmatpush1.msra.mxu0 0.0
  %520 = vmatprep.subr.mxu0 0.0
  %521 = vmatpush1.msra.mxu0 0.0
  %522 = vmatprep.subr.mxu0 0.0
  %523 = vmatpush1.msra.mxu0 0.0
  %524 = vmatprep.subr.mxu0 0.0
  %525 = vmatpush1.msra.mxu0 0.0
  %526 = vmatprep.subr.mxu0 0.0
  %527 = vmatpush1.msra.mxu0 0.0
  %528 = vmatprep.subr.mxu0 0.0
  %529 = vmatpush1.msra.mxu0 0.0
  %530 = vmatprep.subr.mxu0 0.0
  %531 = vmatpush1.msra.mxu0 0.0
  %532 = vmatprep.subr.mxu0 0.0
  %533 = vmatpush1.msra.mxu0 0.0
  %534 = vmatprep.subr.mxu0 0.0
  %535 = vmatpush1.msra.mxu0 0.0
  %536 = vmatprep.subr.mxu0 0.0
  %537 = vmatpush1.msra.mxu0 0.0
  %538 = vmatprep.subr.mxu0 0.0
  %539 = vmatpush1.msra.mxu0 0.0
  %540 = vmatprep.subr.mxu0 0.0
  %541 = vmatpush1.msra.mxu0 0.0
  %542 = vmatprep.subr.mxu0 0.0
  %543 = vmatpush1.msra.mxu0 0.0
  %544 = vmatprep.subr.mxu0 0.0
  %545 = vmatpush1.msra.mxu0 0.0
  %546 = vmatprep.subr.mxu0 0.0
  %547 = vmatpush1.msra.mxu0 0.0
  %548 = vmatprep.subr.mxu0 0.0
  %549 = vmatpush1.msra.mxu0 0.0
  %550 = vmatprep.subr.mxu0 0.0
  %551 = vmatpush1.msra.mxu0 0.0
  %552 = vmatprep.subr.mxu0 0.0
  %553 = vmatpush1.msra.mxu0 0.0
  %554 = vmatprep.subr.mxu0 0.0
  %555 = vmatpush1.msra.mxu0 0.0
  %556 = vmatprep.subr.mxu0 0.0
  %557 = vmatpush1.msra.mxu0 0.0
  %558 = vmatprep.subr.mxu0 0.0
  %559 = vmatpush1.msra.mxu0 0.0
  %560 = vmatprep.subr.mxu0 0.0
  %561 = vmatpush1.msra.mxu0 0.0
  %562 = vmatprep.subr.mxu0 0.0
  %563 = vmatpush1.msra.mxu0 0.0
  %564 = vmatprep.subr.mxu0 0.0
  %565 = vmatpush1.msra.mxu0 0.0
  %566 = vmatprep.subr.mxu0 0.0
  %567 = vmatpush1.msra.mxu0 0.0
  %568 = vmatprep.subr.mxu0 0.0
  %569 = vmatpush1.msra.mxu0 0.0
  %570 = vmatprep.mubr.f32.mxu0 0.0
  %571 = vmatmul.mubr.f32.gmra.mrb[0].mxu0 %v495
  %v572 = vpop.f32.mrb[0].mxu0
  %v573 = vadd.f32 %v493, %v572
  %v574 = vpop.f32.mrb[0].mxu0
  %575 = vmatprep.mubr.f32.mxu0 0.0
  %576 = vmatmul.mubr.f32.gmra.mrb[0].mxu0 %v498
  %v577 = vpop.f32.mrb[0].mxu0
  %v578 = vadd.f32 %v493, %v577
  %v579 = vpop.f32.mrb[0].mxu0
  %580 = vmatprep.mubr.f32.mxu0 0.0
  %581 = vmatmul.mubr.f32.gmra.mrb[0].mxu0 %v501
  %v582 = vpop.f32.mrb[0].mxu0
  %v583 = vadd.f32 %v493, %v582
  %v584 = vpop.f32.mrb[0].mxu0
  %585 = vmatprep.mubr.f32.mxu0 0.0
  %586 = vmatmul.mubr.f32.gmra.mrb[0].mxu0 %v504
  %v587 = vpop.f32.mrb[0].mxu0
  %v588 = vadd.f32 %v493, %v587
  %v589 = vpop.f32.mrb[0].mxu0
  %590 = vdwg.mxu0
  %v591 = vxor.u32 %v573, 2147483648
  %v592 = vxor.u32 %v578, 2147483648
  %v593 = vxor.u32 %v583, 2147483648
  %v594 = vxor.u32 %v588, 2147483648
  %v595 = vmul.f32 %v591, 1.442695
  %v596 = vpow.pop %v595
  %v597 = vmul.f32 %v592, 1.442695
  %v598 = vpow.pop %v597
  %v599 = vmul.f32 %v593, 1.442695
  %v600 = vpow.pop %v599
  %v601 = vmul.f32 %v594, 1.442695
  %v602 = vpow.pop %v601
  %v603 = vadd.f32 %v596, 1.0
  %v604 = vadd.f32 %v598, 1.0
  %v605 = vadd.f32 %v600, 1.0
  %v606 = vadd.f32 %v602, 1.0
  %v607 = vrcp.pop %v603
  %v608 = vmul.f32 1.0, %v607
  %v609 = vrcp.pop %v604
  %v610 = vmul.f32 1.0, %v609
  %v611 = vrcp.pop %v605
  %v612 = vmul.f32 1.0, %v611
  %v613 = vrcp.pop %v606
  %v614 = vmul.f32 1.0, %v613
  %v615 = vmul.f32 %v573, %v608
  %v616 = vmul.f32 %v578, %v610
  %v617 = vmul.f32 %v583, %v612
  %v618 = vmul.f32 %v588, %v614
  %vm619 = vcmask 24576
  %620 = vst.msk [vmem:[#allocation3] sm:$0x1] %vm619, 0.0
  %621 = vst.msk [vmem:[#allocation3 + $0x18] sm:$0x1] %vm619, 0.0
  %622 = vst.msk [vmem:[#allocation3 + $0x11] sm:$0x1] %vm619, 0.0
  %623 = vst.msk [vmem:[#allocation3 + $0x29] sm:$0x1] %vm619, 0.0
  %624 = vst.msk [vmem:[#allocation3 + $0x1] sm:$0xff] %vm47, %v29
  %625 = vst.msk [vmem:[#allocation3 + $0x9] sm:$0xff] %vm47, %v30
  %626 = vst.msk [vmem:[#allocation3 + $0x19] sm:$0xff] %vm47, %v31
  %627 = vst.msk [vmem:[#allocation3 + $0x21] sm:$0xff] %vm47, %v32
  %v628 = vld [vmem:[#allocation3] sm:$0xff]
  %v629 = vld [vmem:[#allocation3 + $0x8] sm:$0xff]
  %v630 = vld [vmem:[#allocation3 + $0x18] sm:$0xff]
  %v631 = vld [vmem:[#allocation3 + $0x20] sm:$0xff]
  %v632 = vld [vmem:[#allocation3 + $0x1] sm:$0xff]
  %v633 = vld [vmem:[#allocation3 + $0x9] sm:$0xff]
  %v634 = vld [vmem:[#allocation3 + $0x19] sm:$0xff]
  %v635 = vld [vmem:[#allocation3 + $0x21] sm:$0xff]
  %v636 = vld [vmem:[#allocation3 + $0x2] sm:$0xff]
  %v637 = vld [vmem:[#allocation3 + $0xa] sm:$0xff]
  %v638 = vld [vmem:[#allocation3 + $0x1a] sm:$0xff]
  %v639 = vld [vmem:[#allocation3 + $0x22] sm:$0xff]
  %644 = vrot.lane.b32.xlu0 %v632, 4
  %v645 = vpop.permute.xlu0 %644
  %646 = vrot.lane.b32.xlu0 %v633, 4
  %v647 = vpop.permute.xlu0 %646
  %648 = vrot.lane.b32.xlu0 %v634, 4
  %v649 = vpop.permute.xlu0 %648
  %650 = vrot.lane.b32.xlu0 %v635, 4
  %v651 = vpop.permute.xlu0 %650
  %660 = vrot.lane.b32.xlu0 %v636, 8
  %v661 = vpop.permute.xlu0 %660
  %662 = vrot.lane.b32.xlu0 %v637, 8
  %v663 = vpop.permute.xlu0 %662
  %664 = vrot.lane.b32.xlu0 %v638, 8
  %v665 = vpop.permute.xlu0 %664
  %666 = vrot.lane.b32.xlu0 %v639, 8
  %v667 = vpop.permute.xlu0 %666
  %v672 = vsel %vm47, %v628, %v645
  %v673 = vsel %vm47, %v629, %v647
  %v674 = vsel %vm47, %v630, %v649
  %v675 = vsel %vm47, %v631, %v651
  %vm676 = vcmask 64512
  %v677 = vsel %vm676, %v672, %v661
  %v678 = vsel %vm676, %v673, %v663
  %v679 = vsel %vm676, %v674, %v665
  %v680 = vsel %vm676, %v675, %v667
  %v681 = vlaneseq
  %v682 = vshrl.u32 %v681, 7
  %v683 = vsub.s32 3, %v682
  %v684 = vrot.slane %v42, %v683
  %vm685 = vcmask 97280
  %v687 = vsel %vm685, %v677, 0
  %v690 = vsel %vm685, %v678, 0
  %v693 = vsel %vm685, %v679, 0
  %v696 = vsel %vm685, %v680, 0
  %v699 = vsel %vm60, %v41, 0
  %701 = vmatprep.subr.mxu0 0.0
  %702 = vmatpush1.msra.mxu0 %v40
  %703 = vmatprep.subr.mxu0 0.0
  %704 = vmatpush1.msra.mxu0 %v699
  %705 = vmatprep.subr.mxu0 0.0
  %706 = vmatpush1.msra.mxu0 0.0
  %707 = vmatprep.subr.mxu0 0.0
  %708 = vmatpush1.msra.mxu0 0.0
  %709 = vmatprep.subr.mxu0 0.0
  %710 = vmatpush1.msra.mxu0 0.0
  %711 = vmatprep.subr.mxu0 0.0
  %712 = vmatpush1.msra.mxu0 0.0
  %713 = vmatprep.subr.mxu0 0.0
  %714 = vmatpush1.msra.mxu0 0.0
  %715 = vmatprep.subr.mxu0 0.0
  %716 = vmatpush1.msra.mxu0 0.0
  %717 = vmatprep.subr.mxu0 0.0
  %718 = vmatpush1.msra.mxu0 0.0
  %719 = vmatprep.subr.mxu0 0.0
  %720 = vmatpush1.msra.mxu0 0.0
  %721 = vmatprep.subr.mxu0 0.0
  %722 = vmatpush1.msra.mxu0 0.0
  %723 = vmatprep.subr.mxu0 0.0
  %724 = vmatpush1.msra.mxu0 0.0
  %725 = vmatprep.subr.mxu0 0.0
  %726 = vmatpush1.msra.mxu0 0.0
  %727 = vmatprep.subr.mxu0 0.0
  %728 = vmatpush1.msra.mxu0 0.0
  %729 = vmatprep.subr.mxu0 0.0
  %730 = vmatpush1.msra.mxu0 0.0
  %731 = vmatprep.subr.mxu0 0.0
  %732 = vmatpush1.msra.mxu0 0.0
  %733 = vmatprep.subr.mxu0 0.0
  %734 = vmatpush1.msra.mxu0 0.0
  %735 = vmatprep.subr.mxu0 0.0
  %736 = vmatpush1.msra.mxu0 0.0
  %737 = vmatprep.subr.mxu0 0.0
  %738 = vmatpush1.msra.mxu0 0.0
  %739 = vmatprep.subr.mxu0 0.0
  %740 = vmatpush1.msra.mxu0 0.0
  %741 = vmatprep.subr.mxu0 0.0
  %742 = vmatpush1.msra.mxu0 0.0
  %743 = vmatprep.subr.mxu0 0.0
  %744 = vmatpush1.msra.mxu0 0.0
  %745 = vmatprep.subr.mxu0 0.0
  %746 = vmatpush1.msra.mxu0 0.0
  %747 = vmatprep.subr.mxu0 0.0
  %748 = vmatpush1.msra.mxu0 0.0
  %749 = vmatprep.subr.mxu0 0.0
  %750 = vmatpush1.msra.mxu0 0.0
  %751 = vmatprep.subr.mxu0 0.0
  %752 = vmatpush1.msra.mxu0 0.0
  %753 = vmatprep.subr.mxu0 0.0
  %754 = vmatpush1.msra.mxu0 0.0
  %755 = vmatprep.subr.mxu0 0.0
  %756 = vmatpush1.msra.mxu0 0.0
  %757 = vmatprep.subr.mxu0 0.0
  %758 = vmatpush1.msra.mxu0 0.0
  %759 = vmatprep.subr.mxu0 0.0
  %760 = vmatpush1.msra.mxu0 0.0
  %761 = vmatprep.subr.mxu0 0.0
  %762 = vmatpush1.msra.mxu0 0.0
  %763 = vmatprep.subr.mxu0 0.0
  %764 = vmatpush1.msra.mxu0 0.0
  %765 = vmatprep.mubr.f32.mxu0 0.0
  %766 = vmatmul.mubr.f32.gmra.mrb[0].mxu0 %v687
  %v767 = vpop.f32.mrb[0].mxu0
  %v768 = vadd.f32 %v684, %v767
  %v769 = vpop.f32.mrb[0].mxu0
  %770 = vmatprep.mubr.f32.mxu0 0.0
  %771 = vmatmul.mubr.f32.gmra.mrb[0].mxu0 %v690
  %v772 = vpop.f32.mrb[0].mxu0
  %v773 = vadd.f32 %v684, %v772
  %v774 = vpop.f32.mrb[0].mxu0
  %775 = vmatprep.mubr.f32.mxu0 0.0
  %776 = vmatmul.mubr.f32.gmra.mrb[0].mxu0 %v693
  %v777 = vpop.f32.mrb[0].mxu0
  %v778 = vadd.f32 %v684, %v777
  %v779 = vpop.f32.mrb[0].mxu0
  %780 = vmatprep.mubr.f32.mxu0 0.0
  %781 = vmatmul.mubr.f32.gmra.mrb[0].mxu0 %v696
  %v782 = vpop.f32.mrb[0].mxu0
  %v783 = vadd.f32 %v684, %v782
  %v784 = vpop.f32.mrb[0].mxu0
  %785 = vdwg.mxu0
  %v786 = vxor.u32 %v768, 2147483648
  %v787 = vxor.u32 %v773, 2147483648
  %v788 = vxor.u32 %v778, 2147483648
  %v789 = vxor.u32 %v783, 2147483648
  %v790 = vmul.f32 %v786, 1.442695
  %v791 = vpow.pop %v790
  %v792 = vmul.f32 %v787, 1.442695
  %v793 = vpow.pop %v792
  %v794 = vmul.f32 %v788, 1.442695
  %v795 = vpow.pop %v794
  %v796 = vmul.f32 %v789, 1.442695
  %v797 = vpow.pop %v796
  %v798 = vadd.f32 %v791, 1.0
  %v799 = vadd.f32 %v793, 1.0
  %v800 = vadd.f32 %v795, 1.0
  %v801 = vadd.f32 %v797, 1.0
  %v802 = vrcp.pop %v798
  %v803 = vmul.f32 1.0, %v802
  %v804 = vrcp.pop %v799
  %v805 = vmul.f32 1.0, %v804
  %v806 = vrcp.pop %v800
  %v807 = vmul.f32 1.0, %v806
  %v808 = vrcp.pop %v801
  %v809 = vmul.f32 1.0, %v808
  %v810 = vmul.f32 %v768, %v803
  %v811 = vmul.f32 %v773, %v805
  %v812 = vmul.f32 %v778, %v807
  %v813 = vmul.f32 %v783, %v809
  %v814 = vadd.f32 %v615, %v810
  %v815 = vadd.f32 %v616, %v811
  %v816 = vadd.f32 %v617, %v812
  %v817 = vadd.f32 %v618, %v813
  %818 = vst.msk [vmem:[%s8] sm:$0xff] %vm676, %v814
  %819 = vst.msk [vmem:[%s8 + $0x8] sm:$0xff] %vm676, %v815
  %820 = vst.msk [vmem:[%s8 + $0x10] sm:$0xff] %vm676, %v816
  %821 = vst.msk [vmem:[%s8 + $0x18] sm:$0xff] %vm676, %v817
  // Predicated region
  $region34: #{tpu_custom_call.1} parent=0 // pred_check
    _
  $region35: #{tpu_custom_call.1} parent=0 // pred_check_branch
    %823 = sbr.rel (0) target = $region37
  $region36: #{tpu_custom_call.1} parent=0 // pred_region
    _
  $region37: #{tpu_custom_call.1} parent=0 // pred_fallthru
    _
  // Predicated region
  $region38: #{tpu_custom_call.1} parent=0 // pred_check
    _
  $region39: #{tpu_custom_call.1} parent=0 // pred_check_branch
    %825 = sbr.rel (0) target = $region41
  $region40: #{tpu_custom_call.1} parent=0 // pred_region
    _
  $region41: #{tpu_custom_call.1} parent=0 // pred_fallthru
    _

</llo_original>
